<compile_context>
chip_gen: v6e
topology: v6e:2x2x1
jax: 0.10.0
libtpu: 0.0.40
codegen_flags: <defaults>
</compile_context>

<pallas_src>
import functools

import numpy as np
import jax
import jax.numpy as jnp
from jax.experimental import pallas as pl
from jax.experimental.pallas import tpu as pltpu


def _round_up(v: int, m: int) -> int:
    return -(-v // m) * m


def _pool_matrix_np(out_size: int, in_size: int, kernel: int, stride: int) -> np.ndarray:
    """P[o, i] = 1.0 iff input index i is inside pooling window o (VALID, no pad)."""
    o = np.arange(out_size)[:, None]          # (O, 1)
    i = np.arange(in_size)[None, :]           # (1, I)
    start = o * stride
    return ((i >= start) & (i < start + kernel)).astype(np.float32)


def _vmem_capacity_bytes() -> int:
    """Per-generation VMEM capacity (falls back to the v7x per-TC minimum)."""
    try:
        return int(pltpu.get_tpu_info().vmem_capacity_bytes)
    except Exception:
        return 64 << 20


def _avgpool_kernel(x_ref, pt_ref, o_ref, *, scale):
    # x_ref : (B, H*W)      B batch*channel rows, native dtype (no up-cast)
    # pt_ref: (H*W, Ho*Wo)  transposed fused (Kronecker) pooling matrix
    # o_ref : (B, Ho*Wo)
    y = jnp.dot(x_ref[...], pt_ref[...], preferred_element_type=jnp.float32)
    if scale is not None:                      # only for sub-f32 inputs (0/1 P entries)
        y = y * scale
    o_ref[...] = y.astype(o_ref.dtype)


@functools.partial(jax.jit, static_argnums=(1, 2))
def _downsample_jit(x, stride, kernel_size):
    n, c, h, w = x.shape
    ho = (h - kernel_size) // stride + 1
    wo = (w - kernel_size) // stride + 1
    assert ho > 0 and wo > 0, "input spatial dims too small for pooling window"

    nc, hw, howo = n * c, h * w, ho * wo
    itemsize = jnp.dtype(x.dtype).itemsize
    vmem_cap = _vmem_capacity_bytes()

    # VMEM-padded tile extents (lane dim pads to 128, sublane to 8).
    lane_hw = _round_up(hw, 128)
    lane_howo = _round_up(howo, 128)

    # Fused, transposed pooling matrix Pt[ih*W+iw, oh*Wo+ow] = Ph[oh,ih]*Pw[ow,iw],
    # built with numpy so it becomes a compile-time constant.
    ph = _pool_matrix_np(ho, h, kernel_size, stride)       # (Ho, H)
    pw = _pool_matrix_np(wo, w, kernel_size, stride)       # (Wo, W)
    pfull_t = np.kron(ph, pw).T                            # (H*W, Ho*Wo), 0/1

    # Generation-aware size guard for the fused form (single-buffered P).
    p_bytes = _round_up(hw, 8) * lane_howo * itemsize
    assert p_bytes <= vmem_cap // 8, (
        "kron pooling matrix too large for this fused form on this chip; "
        "use the separable two-matmul form")

    inv_area = 1.0 / float(kernel_size * kernel_size)
    if x.dtype == jnp.float32:
        pt = jnp.asarray(pfull_t * inv_area, dtype=jnp.float32)  # scale folded (free)
        scale = None
    else:
        pt = jnp.asarray(pfull_t, dtype=x.dtype)           # 0/1 exact in bf16/fp16
        scale = inv_area                                    # applied once to f32 accum

    # Zero-copy row layout: (N, C, H, W) -> (N*C, H*W); consumed as-is (no .T).
    x_rows = x.reshape(nc, hw)

    # ---- block sizing from a VMEM budget (large tiles, sublane-aligned) ----
    budget = min(vmem_cap // 3, 24 << 20)                  # bytes for data tiles
    per_row = (2 * lane_hw + 2 * lane_howo) * itemsize     # dbl-buffered in + out per row
    b_blk = max(8, (budget // per_row) // 8 * 8)
    if b_blk >= nc:
        if nc >= 512:
            # Keep >= 2 grid steps so ("parallel",) can shard across v7x's 2 TCs.
            b_blk = _round_up((nc + 1) // 2, 8)
        else:
            b_blk = nc
    grid = (pl.cdiv(nc, b_blk),)

    need = ((2 * b_blk * lane_hw + 2 * b_blk * lane_howo) * itemsize
            + p_bytes + (2 << 20))                          # headroom
    vmem_limit = int(min(max(need, 4 << 20), (vmem_cap * 3) // 4))

    ce = pl.CostEstimate(
        flops=2 * nc * hw * howo,
        transcendentals=0,
        bytes_accessed=(nc * hw + nc * howo) * itemsize + pfull_t.size * itemsize,
    )

    def _build_call(p_pipeline_mode):
        if p_pipeline_mode is None:
            p_spec = pl.BlockSpec((hw, howo), lambda b: (0, 0))
        else:
            p_spec = pl.BlockSpec((hw, howo), lambda b: (0, 0),
                                  pipeline_mode=p_pipeline_mode)
        return pl.pallas_call(
            functools.partial(_avgpool_kernel, scale=scale),
            out_shape=jax.ShapeDtypeStruct((nc, howo), x.dtype),
            grid_spec=pltpu.PrefetchScalarGridSpec(
                num_scalar_prefetch=0,
                grid=grid,
                in_specs=[
                    pl.BlockSpec((b_blk, hw), lambda b: (b, 0)),  # x rows, natural layout
                    p_spec,                                       # Pt: resident, fetched once
                ],
                out_specs=pl.BlockSpec((b_blk, howo), lambda b: (b, 0)),
            ),
            compiler_params=pltpu.CompilerParams(
                dimension_semantics=("parallel",),                # megacore / 2-TC sharding
                vmem_limit_bytes=vmem_limit,
            ),
            cost_estimate=ce,
        )

    try:
        out_rows = _build_call(pl.Buffered(1))(x_rows, pt)
    except Exception:
        # Fallback: JAX version without single-buffer pipeline_mode support.
        # P's constant index_map still means it is only DMA'd once.
        out_rows = _build_call(None)(x_rows, pt)

    # (N*C, Ho*Wo) -> NCHW: contiguous reshape, zero data movement.
    return out_rows.reshape(n, c, ho, wo)


def downsample(x: jnp.ndarray, stride: int, kernel_size=None) -> jnp.ndarray:
    """AvgPool2d(kernel_size, stride) on NCHW input, matching DownSample.forward."""
    if kernel_size is None:
        kernel_size = 3 if stride < 3 else stride + 3
    return _downsample_jit(x, int(stride), int(kernel_size))


def _avgpool_reference(x, stride, kernel_size):
    # Pure-JAX reference (reduce_window) for correctness checking.
    summed = jax.lax.reduce_window(
        x.astype(jnp.float32), 0.0, jax.lax.add,
        window_dimensions=(1, 1, kernel_size, kernel_size),
        window_strides=(1, 1, stride, stride),
        padding="VALID",
    )
    return (summed / float(kernel_size * kernel_size)).astype(x.dtype)


if __name__ == "__main__":
    stride = 2                      # -> kernel_size = 3 (stride < 3 branch)
    kernel_size = 3 if stride < 3 else stride + 3

    key = jax.random.PRNGKey(0)
    x = jax.random.normal(key, (2, 4, 16, 16), dtype=jnp.float32)   # NCHW

    # f32 path (scale folded into the f32 pooling matrix).
    y = jax.block_until_ready(downsample(x, stride))
    y_ref = _avgpool_reference(x, stride, kernel_size)
    assert y.shape == (2, 4, 7, 7), y.shape
    assert jnp.allclose(y, y_ref, atol=1e-5, rtol=1e-5), "f32 mismatch vs reference"

    # sub-f32 path (exact 0/1 P, scale applied once to the f32 accumulator).
    x_bf16 = x.astype(jnp.bfloat16)
    y_bf = jax.block_until_ready(downsample(x_bf16, stride))
    y_bf_ref = _avgpool_reference(x_bf16, stride, kernel_size)
    assert jnp.allclose(y_bf.astype(jnp.float32), y_bf_ref.astype(jnp.float32),
                        atol=2e-2, rtol=2e-2), "bf16 mismatch vs reference"

    print("KERNEL_OK")
</pallas_src>

<mosaic_0001>
module attributes {stable_mosaic.version = 11 : i64} {
  func.func @_avgpool_kernel(%arg0: i32, %arg1: memref<8x256xf32, #tpu.memory_space<vmem>>, %arg2: memref<256x49xf32, #tpu.memory_space<vmem>>, %arg3: memref<8x49xf32, #tpu.memory_space<vmem>>) attributes {dimension_semantics = [#tpu.dimension_semantics<parallel>], iteration_bounds = array<i64: 1>, scalar_prefetch = 0 : i64, scratch_operands = 0 : i64, tpu.core_type = #tpu.core_type<tc>, window_params = [{transform_indices = @transform_0, window_bounds = array<i64: 8, 256>}, {pipeline_mode = #tpu.pipeline_mode<synchronous>, transform_indices = @transform_1, window_bounds = array<i64: 256, 49>}, {transform_indices = @transform_2, window_bounds = array<i64: 8, 49>}]} {
    %c0 = arith.constant 0 : index
    %c0_0 = arith.constant 0 : index
    %0 = vector.load %arg1[%c0, %c0_0] : memref<8x256xf32, #tpu.memory_space<vmem>>, vector<8x256xf32>
    %c0_1 = arith.constant 0 : index
    %c0_2 = arith.constant 0 : index
    %1 = vector.load %arg2[%c0_1, %c0_2] : memref<256x49xf32, #tpu.memory_space<vmem>>, vector<256x49xf32>
    %cst = arith.constant dense<0.000000e+00> : vector<8x49xf32>
    %2 = tpu.matmul %0, %1, %cst {dimension_numbers = #tpu.dot_dimension_numbers<[1], [0], [0], [1], [0, 0, 1, 1], [], []>} : vector<8x256xf32>, vector<256x49xf32>, vector<8x49xf32> -> vector<8x49xf32>
    %c0_3 = arith.constant 0 : index
    %c0_4 = arith.constant 0 : index
    %3 = vector.load %arg3[%c0_3, %c0_4] : memref<8x49xf32, #tpu.memory_space<vmem>>, vector<8x49xf32>
    tpu.vector_store %arg3[%c0_3, %c0_4], %2 {strides = array<i32>} : memref<8x49xf32, #tpu.memory_space<vmem>>, vector<8x49xf32>,
    return
  }
  func.func @transform_0(%arg0: i32) -> (i32, i32) {
    %c0_i32 = arith.constant 0 : i32
    %c0_i32_0 = arith.constant 0 : i32
    return %arg0, %c0_i32 : i32, i32
  }
  func.func @transform_1(%arg0: i32) -> (i32, i32) {
    %c0_i32 = arith.constant 0 : i32
    %c0_i32_0 = arith.constant 0 : i32
    %c0_i32_1 = arith.constant 0 : i32
    return %c0_i32, %c0_i32_0 : i32, i32
  }
  func.func @transform_2(%arg0: i32) -> (i32, i32) {
    %c0_i32 = arith.constant 0 : i32
    %c0_i32_0 = arith.constant 0 : i32
    return %arg0, %c0_i32 : i32, i32
  }
}

</mosaic_0001>

<llo_original>
// kernel: _downsample_jit.1
$region0: #{_downsample_jit.1}
  #allocation0 [shape = 'u32[]', space=smem, size = 0x4, offset = 0x4, fixed_abs, tag = 'smem constant byte address 0x4 - core index']
  #allocation1 [shape = 'u32[144,128]{1,0:T(1,128)}', space=vmem, size = 0x12000, scoped, tag = 'internal scratch']
  %s0 = inlined_call_operand.vmem [shape: f32[8,256], index: 0, kind: input, shape index: {}]
  %s1 = inlined_call_operand.hbm [shape: f32[256,49], index: 1, kind: input, shape index: {}]
  %s2 = inlined_call_operand.vmem [shape: f32[8,49], index: 2, kind: output, shape index: {}]
  %s3 = sld [smem:[#allocation0]]
  $region22: #{_downsample_jit.1} parent=0
    _
  %s5 = ssub.s32 1, %s3
  %s6 = scalar_select 0, %s5, %s3
  $region1: #{_downsample_jit.1} parent=0
    #allocation2 [shape = 'u8[131072]{0}', space=vmem, size = 0x20000, scoped, tag = 'input window, operand 1, single buffered']
    #allocation3 [shape = 's32[1]{0}', space=sflag, size = 0x4, scoped, tag = 'scoped memory for _downsample_jit.1']
    %7 = vsyncpa [#allocation3], 0
    // Predicated region
    $region2: #{_downsample_jit.1} parent=1 // pred_check
      _
    $region3: #{_downsample_jit.1} parent=1 // pred_check_branch
      %9 = sbr.rel (0) target = $region5
    $region4: #{_downsample_jit.1} parent=1 // pred_region
      _
    $region5: #{_downsample_jit.1} parent=1 // pred_fallthru
      _
    // Predicated region
    $region6: #{_downsample_jit.1} parent=1 // pred_check
      _
    $region7: #{_downsample_jit.1} parent=1 // pred_check_branch
      %11 = sbr.rel (0) target = $region9
    $region8: #{_downsample_jit.1} parent=1 // pred_region
      %s13 = ssub.s32 4096, 4096
      %14 = vsyncadd [#allocation3], %s13
      %s15 = sshll.u32 [#allocation2], 4
      %s16 = int_to_ptr.vmem [resolvable:$true] %s15
      %21 = dma.hbm_to_vmem [thread:$0]  %s1, 4096, %s16, [#allocation3], 128, 128, 8
    $region9: #{_downsample_jit.1} parent=1 // pred_fallthru
      _
    // Predicated region
    $region10: #{_downsample_jit.1} parent=1 // pred_check
      _
    $region11: #{_downsample_jit.1} parent=1 // pred_check_branch
      %23 = sbr.rel (0) target = $region13
    $region12: #{_downsample_jit.1} parent=1 // pred_region
      %24 = dma.done [#allocation3], 4096
    $region13: #{_downsample_jit.1} parent=1 // pred_fallthru
      _
    %v25 = vld [vmem:[%s0] sm:$0xff]
    %v26 = vld [vmem:[%s0 + $0x8] sm:$0xff]
    %v27 = vld [vmem:[#allocation2] sm:$0xff]
    %v28 = vld [vmem:[#allocation2 + $0x8] sm:$0xff]
    %v29 = vld [vmem:[#allocation2 + $0x10] sm:$0xff]
    %v30 = vld [vmem:[#allocation2 + $0x18] sm:$0xff]
    %v31 = vld [vmem:[#allocation2 + $0x20] sm:$0xff]
    %v32 = vld [vmem:[#allocation2 + $0x28] sm:$0xff]
    %v33 = vld [vmem:[#allocation2 + $0x30] sm:$0xff]
    %v34 = vld [vmem:[#allocation2 + $0x38] sm:$0xff]
    %v35 = vld [vmem:[#allocation2 + $0x40] sm:$0xff]
    %v36 = vld [vmem:[#allocation2 + $0x48] sm:$0xff]
    %v37 = vld [vmem:[#allocation2 + $0x50] sm:$0xff]
    %v38 = vld [vmem:[#allocation2 + $0x58] sm:$0xff]
    %v39 = vld [vmem:[#allocation2 + $0x60] sm:$0xff]
    %v40 = vld [vmem:[#allocation2 + $0x68] sm:$0xff]
    %v41 = vld [vmem:[#allocation2 + $0x70] sm:$0xff]
    %v42 = vld [vmem:[#allocation2 + $0x78] sm:$0xff]
    %v43 = vld [vmem:[#allocation2 + $0x80] sm:$0xff]
    %v44 = vld [vmem:[#allocation2 + $0x88] sm:$0xff]
    %v45 = vld [vmem:[#allocation2 + $0x90] sm:$0xff]
    %v46 = vld [vmem:[#allocation2 + $0x98] sm:$0xff]
    %v47 = vld [vmem:[#allocation2 + $0xa0] sm:$0xff]
    %v48 = vld [vmem:[#allocation2 + $0xa8] sm:$0xff]
    %v49 = vld [vmem:[#allocation2 + $0xb0] sm:$0xff]
    %v50 = vld [vmem:[#allocation2 + $0xb8] sm:$0xff]
    %v51 = vld [vmem:[#allocation2 + $0xc0] sm:$0xff]
    %v52 = vld [vmem:[#allocation2 + $0xc8] sm:$0xff]
    %v53 = vld [vmem:[#allocation2 + $0xd0] sm:$0xff]
    %v54 = vld [vmem:[#allocation2 + $0xd8] sm:$0xff]
    %v55 = vld [vmem:[#allocation2 + $0xe0] sm:$0xff]
    %v56 = vld [vmem:[#allocation2 + $0xe8] sm:$0xff]
    %v57 = vld [vmem:[#allocation2 + $0xf0] sm:$0xff]
    %v58 = vld [vmem:[#allocation2 + $0xf8] sm:$0xff]
    %59 = vmatprep.subr.mxu0 0.0
    %60 = vmatpush1.msra.mxu0 %v42
    %61 = vmatprep.subr.mxu0 0.0
    %62 = vmatpush1.msra.mxu0 %v41
    %63 = vmatprep.subr.mxu0 0.0
    %64 = vmatpush1.msra.mxu0 %v40
    %65 = vmatprep.subr.mxu0 0.0
    %66 = vmatpush1.msra.mxu0 %v39
    %67 = vmatprep.subr.mxu0 0.0
    %68 = vmatpush1.msra.mxu0 %v38
    %69 = vmatprep.subr.mxu0 0.0
    %70 = vmatpush1.msra.mxu0 %v37
    %71 = vmatprep.subr.mxu0 0.0
    %72 = vmatpush1.msra.mxu0 %v36
    %73 = vmatprep.subr.mxu0 0.0
    %74 = vmatpush1.msra.mxu0 %v35
    %75 = vmatprep.subr.mxu0 0.0
    %76 = vmatpush1.msra.mxu0 %v34
    %77 = vmatprep.subr.mxu0 0.0
    %78 = vmatpush1.msra.mxu0 %v33
    %79 = vmatprep.subr.mxu0 0.0
    %80 = vmatpush1.msra.mxu0 %v32
    %81 = vmatprep.subr.mxu0 0.0
    %82 = vmatpush1.msra.mxu0 %v31
    %83 = vmatprep.subr.mxu0 0.0
    %84 = vmatpush1.msra.mxu0 %v30
    %85 = vmatprep.subr.mxu0 0.0
    %86 = vmatpush1.msra.mxu0 %v29
    %87 = vmatprep.subr.mxu0 0.0
    %88 = vmatpush1.msra.mxu0 %v28
    %89 = vmatprep.subr.mxu0 0.0
    %90 = vmatpush1.msra.mxu0 %v27
    %91 = vmatprep.subr.mxu0 0.0
    %92 = vmatpush2.msra.mxu0 %v58
    %93 = vmatprep.subr.mxu0 0.0
    %94 = vmatpush2.msra.mxu0 %v57
    %95 = vmatprep.subr.mxu0 0.0
    %96 = vmatpush2.msra.mxu0 %v56
    %97 = vmatprep.subr.mxu0 0.0
    %98 = vmatpush2.msra.mxu0 %v55
    %99 = vmatprep.subr.mxu0 0.0
    %100 = vmatpush2.msra.mxu0 %v54
    %101 = vmatprep.subr.mxu0 0.0
    %102 = vmatpush2.msra.mxu0 %v53
    %103 = vmatprep.subr.mxu0 0.0
    %104 = vmatpush2.msra.mxu0 %v52
    %105 = vmatprep.subr.mxu0 0.0
    %106 = vmatpush2.msra.mxu0 %v51
    %107 = vmatprep.subr.mxu0 0.0
    %108 = vmatpush2.msra.mxu0 %v50
    %109 = vmatprep.subr.mxu0 0.0
    %110 = vmatpush2.msra.mxu0 %v49
    %111 = vmatprep.subr.mxu0 0.0
    %112 = vmatpush2.msra.mxu0 %v48
    %113 = vmatprep.subr.mxu0 0.0
    %114 = vmatpush2.msra.mxu0 %v47
    %115 = vmatprep.subr.mxu0 0.0
    %116 = vmatpush2.msra.mxu0 %v46
    %117 = vmatprep.subr.mxu0 0.0
    %118 = vmatpush2.msra.mxu0 %v45
    %119 = vmatprep.subr.mxu0 0.0
    %120 = vmatpush2.msra.mxu0 %v44
    %121 = vmatprep.subr.mxu0 0.0
    %122 = vmatpush2.msra.mxu0 %v43
    %123 = vmatprep.mubr.f32.mxu0 %v26
    %124 = vmatmul.mubr.f32.gmra.mxu0 %v25
    %v125 = vpop.f32.mrf.mxu0
    %v126 = vadd.f32 0.0, %v125
    %v127 = vpop.f32.mrf.mxu0
    %128 = vdwg.mxu0
    %vm129 = vcmask 400384
    %130 = vst.msk [vmem:[%s2] sm:$0xff] %vm129, %v126
    // Predicated region
    $region14: #{_downsample_jit.1} parent=1 // pred_check
      _
    $region15: #{_downsample_jit.1} parent=1 // pred_check_branch
      %132 = sbr.rel (0) target = $region17
    $region16: #{_downsample_jit.1} parent=1 // pred_region
      _
    $region17: #{_downsample_jit.1} parent=1 // pred_fallthru
      _
    // Predicated region
    $region18: #{_downsample_jit.1} parent=1 // pred_check
      _
    $region19: #{_downsample_jit.1} parent=1 // pred_check_branch
      %134 = sbr.rel (0) target = $region21
    $region20: #{_downsample_jit.1} parent=1 // pred_region
      _
    $region21: #{_downsample_jit.1} parent=1 // pred_fallthru
      _
    %135 = vsyncpa [#allocation3], 1

</llo_original>
